<compile_context>
chip_gen: v7x
topology: tpu7x:2x2x1
jax: 0.10.0
libtpu: 0.0.40
codegen_flags: <defaults>
</compile_context>

<pallas_src>
import numpy as np
import jax
import jax.numpy as jnp
from jax.experimental import pallas as pl
from jax.experimental.pallas import tpu as pltpu


# ----------------------------------------------------------------------------
# Small host-side packing helpers
# ----------------------------------------------------------------------------

def _align(n, a):
    return ((n + a - 1) // a) * a


def _pack_rows(blocks, width, align, dtype):
    """Stack 2-D blocks at `align`-aligned row offsets into one [R, width] slab."""
    offs, r = [], 0
    for b in blocks:
        offs.append(r)
        r = _align(r + b.shape[0], align)
    slab = np.zeros((r, width), dtype)
    for off, b in zip(offs, blocks):
        slab[off:off + b.shape[0], :b.shape[1]] = b
    return slab, offs


# ----------------------------------------------------------------------------
# Fused Pallas kernel: full GINet forward (both branches fused along lanes)
# ----------------------------------------------------------------------------

def _make_ginet_kernel(lay):
    N, FIN = lay["n"], lay["fin"]
    C0P, C1P, K0, K1 = lay["c0p"], lay["c1p"], lay["k0"], lay["k1"]
    F1, F2 = lay["f1"], lay["f2"]              # packed feature widths: 32, 64
    HID, O, B = lay["hid"], lay["o"], lay["b"]
    sA1, sA2, sW1, sW2 = lay["s_a1"], lay["s_a2"], lay["s_w1"], lay["s_w2"]
    pWF1, pBF1, pWF2 = lay["p_wf1"], lay["p_bf1"], lay["p_wf2"]
    pBF2, pM = lay["p_bf2"], lay["p_m"]

    def kernel(x_ref, s_ref, p_ref, out_ref):
        # bf16 operands feed the MXU; accumulation stays f32.
        x = x_ref[...].astype(jnp.bfloat16)                        # [N, FIN]
        a1 = s_ref[sA1:sA1 + K0 * C0P, 0:N]                        # [K0*C0P, N]   bf16
        a2 = s_ref[sA2:sA2 + K1 * C1P, 0:C0P]                      # [K1*C1P, C0P] bf16
        w1 = s_ref[sW1:sW1 + FIN, 0:F1]                            # [FIN, 32]     bf16
        w2 = s_ref[sW2:sW2 + F1, 0:F2]                             # [32, 64]      bf16

        # conv1 (int & ext fused along lanes): relu((G0@A1) @ (x @ [w1i|w1e]))
        xw = jnp.dot(x, w1, preferred_element_type=jnp.float32)    # [N, 32] f32
        h1 = jnp.maximum(
            jnp.dot(a1, xw.astype(jnp.bfloat16),
                    preferred_element_type=jnp.float32), 0.0)      # [K0*C0P, 32]
        # community max-pool: slot-major folded rows -> K0-1 elementwise maxima
        # (empty slots are zero rows; exact post-ReLU).
        p1 = h1[0:C0P, :]
        for j in range(1, K0):
            p1 = jnp.maximum(p1, h1[j * C0P:(j + 1) * C0P, :])     # [C0P, 32]

        # conv2 (block-diag packed weights): relu((G1@A2) @ (p1 @ blkdiag(w2i,w2e)))
        pw = jnp.dot(p1.astype(jnp.bfloat16), w2,
                     preferred_element_type=jnp.float32)           # [C0P, 64]
        h2 = jnp.maximum(
            jnp.dot(a2, pw.astype(jnp.bfloat16),
                    preferred_element_type=jnp.float32), 0.0)      # [K1*C1P, 64]
        p2 = h2[0:C1P, :]
        for j in range(1, K1):
            p2 = jnp.maximum(p2, h2[j * C1P:(j + 1) * C1P, :])     # [C1P, 64]

        # scatter_mean over batch == precomputed mean-matrix matmul (f32, exact);
        # result directly IS cat([x_int, x_ext], dim=1) thanks to weight packing.
        m = p_ref[pM:pM + B, 0:C1P]                                # [B, C1P] f32
        xcat = jnp.dot(m, p2, preferred_element_type=jnp.float32)  # [B, 64]

        # fc1 -> relu -> (dropout as eval identity) -> fc2, all f32 (tiny).
        wf1 = p_ref[pWF1:pWF1 + F2, 0:HID]
        bf1 = p_ref[pBF1:pBF1 + 1, 0:HID]
        wf2 = p_ref[pWF2:pWF2 + HID, 0:O]
        bf2 = p_ref[pBF2:pBF2 + 1, 0:O]
        hid = jnp.maximum(
            jnp.dot(xcat, wf1, preferred_element_type=jnp.float32) + bf1, 0.0)
        # TODO(synk): F.dropout(p=0.4) is treated as eval-mode identity; stochastic
        # training-mode dropout would need pltpu.prng_* and cannot match torch RNG.
        out_ref[...] = jnp.dot(hid, wf2, preferred_element_type=jnp.float32) + bf2

    return kernel


def _full_spec(shape):
    nd = len(shape)
    return pl.BlockSpec(tuple(int(s) for s in shape), lambda i, _nd=nd: (0,) * _nd)


def ginet_forward_pallas(params, x, prep):
    x = jnp.asarray(x, jnp.float32)
    n, fin = x.shape
    c0p, c1p, k0, k1 = prep["C0P"], prep["C1P"], prep["K0"], prep["K1"]

    # ---- host weight packing: fuse int/ext branches into wide matmuls ----
    w1i = np.asarray(params["conv1"]["w_fc"], np.float32)
    w1e = np.asarray(params["conv1_ext"]["w_fc"], np.float32)
    w2i = np.asarray(params["conv2"]["w_fc"], np.float32)
    w2e = np.asarray(params["conv2_ext"]["w_fc"], np.float32)
    f1 = w1i.shape[1] + w1e.shape[1]                 # 32
    f2 = w2i.shape[1] + w2e.shape[1]                 # 64
    w1p = np.concatenate([w1i, w1e], axis=1)         # [Fin, 32]
    w2p = np.zeros((f1, f2), np.float32)             # blkdiag(w2i, w2e) -> [32, 64]
    w2p[:w2i.shape[0], :w2i.shape[1]] = w2i
    w2p[w2i.shape[0]:, w2i.shape[1]:] = w2e

    # ---- bf16 slab: folded adjacencies (exact integer counts) + conv weights ----
    a1p, a2p, mmean = prep["A1P"], prep["A2P"], prep["M"]
    sw = max(a1p.shape[1], a2p.shape[1], w1p.shape[1], w2p.shape[1])
    s_np, s_offs = _pack_rows([a1p, a2p, w1p, w2p], sw, 16, np.float32)
    s_slab = jnp.asarray(s_np, jnp.bfloat16)

    # ---- f32 slab: fc head weights/biases + scatter_mean matrix ----
    wf1 = np.asarray(params["fc"]["w1"], np.float32)
    bf1 = np.asarray(params["fc"]["b1"], np.float32)
    wf2 = np.asarray(params["fc"]["w2"], np.float32)
    bf2 = np.asarray(params["fc"]["b2"], np.float32)
    pw_ = max(wf1.shape[1], wf2.shape[1], mmean.shape[1])
    p_np, p_offs = _pack_rows([wf1, bf1, wf2, bf2, mmean], pw_, 8, np.float32)
    p_slab = jnp.asarray(p_np)

    b, hid, o = mmean.shape[0], wf1.shape[1], wf2.shape[1]
    lay = dict(n=n, fin=fin, c0p=c0p, c1p=c1p, k0=k0, k1=k1, b=b, o=o,
               f1=f1, f2=f2, hid=hid,
               s_a1=s_offs[0], s_a2=s_offs[1], s_w1=s_offs[2], s_w2=s_offs[3],
               p_wf1=p_offs[0], p_bf1=p_offs[1], p_wf2=p_offs[2],
               p_bf2=p_offs[3], p_m=p_offs[4])

    out_shape = (b, o)
    flops = 2 * (n * fin * f1 + (k0 * c0p) * n * f1
                 + c0p * f1 * f2 + (k1 * c1p) * c0p * f2
                 + b * c1p * f2 + b * f2 * hid + b * hid * o)
    bytes_accessed = x.size * 4 + s_slab.size * 2 + p_slab.size * 4 + b * o * 4

    # NOTE(scale): for realistic graphs, tile the A1' row axis with a real grid
    # (BlockSpec((tm, N)), "parallel" semantics for v7x's 2 TCs; tm sized so
    # double-buffered tiles fit ~32-48 MiB on v7x, ~100 MiB on v5e/v6e).
    return pl.pallas_call(
        _make_ginet_kernel(lay),
        out_shape=jax.ShapeDtypeStruct(out_shape, jnp.float32),
        grid=(1,),
        in_specs=[_full_spec(x.shape), _full_spec(s_slab.shape),
                  _full_spec(p_slab.shape)],
        out_specs=_full_spec(out_shape),
        compiler_params=pltpu.CompilerParams(
            dimension_semantics=("arbitrary",),
            vmem_limit_bytes=32 * 1024 * 1024),
        cost_estimate=pl.CostEstimate(flops=int(flops), transcendentals=0,
                                      bytes_accessed=int(bytes_accessed)),
    )(x, s_slab, p_slab)


# ----------------------------------------------------------------------------
# Host-side (numpy) graph-structure precompute: cluster offsets, pool_edge
# coalescing, adjacency folding (A' = G @ A, slot-major), pooling/mean matrices.
# Pure structure, not device compute.
# ----------------------------------------------------------------------------

def precompute_structure(row, col, edge_attr, batch, cluster0, cluster1, num_graphs):
    row = np.asarray(row).astype(np.int64)
    col = np.asarray(col).astype(np.int64)
    ea = np.asarray(edge_attr).astype(np.float64).reshape(-1)
    batch = np.asarray(batch).astype(np.int64)
    cluster0 = np.asarray(cluster0).astype(np.int64)
    cluster1 = np.asarray(cluster1).astype(np.int64)
    n = batch.shape[0]

    def offset_cluster(cluster, b):
        per_max = np.zeros(num_graphs, np.int64)
        for g in range(num_graphs):
            per_max[g] = cluster[b == g].max()
        offs = np.concatenate([[0], np.cumsum(per_max + 1)[:-1]])
        return cluster + offs[b]

    # get_preloaded_cluster for level 0
    c0 = offset_cluster(cluster0, batch)
    n_c0 = int(c0.max()) + 1

    # conv1 adjacency: A1[n,m] = #edges (row=n, col=m), duplicates counted
    a1 = np.zeros((n, n), np.float32)
    np.add.at(a1, (row, col), 1.0)

    # torch_geometric pool_edge: map endpoints through cluster, drop self loops,
    # coalesce duplicates (edge_attr only feeds the dead attention path)
    pr, pc = c0[row], c0[col]
    keep = pr != pc
    pair_attr = {}
    for r_, c_, a_ in zip(pr[keep], pc[keep], ea[keep]):
        k = (int(r_), int(c_))
        pair_attr[k] = pair_attr.get(k, 0.0) + float(a_)
    if pair_attr:
        keys = sorted(pair_attr.keys())
        row_p = np.array([k[0] for k in keys], np.int64)
        col_p = np.array([k[1] for k in keys], np.int64)
        ea_p = np.array([pair_attr[k] for k in keys], np.float32).reshape(-1, 1)
    else:
        row_p = np.zeros((0,), np.int64)
        col_p = np.zeros((0,), np.int64)
        ea_p = np.zeros((0, 1), np.float32)
    a2 = np.zeros((n_c0, n_c0), np.float32)
    a2[row_p, col_p] = 1.0

    # batch id of each pooled node (all nodes of a cluster share a graph)
    batch_p = np.zeros(n_c0, np.int64)
    batch_p[c0] = batch

    # get_preloaded_cluster for level 1 (cluster1 given per pooled node)
    c1 = offset_cluster(cluster1, batch_p)
    n_c1 = int(c1.max()) + 1
    batch_pp = np.zeros(n_c1, np.int64)
    batch_pp[c1] = batch_p

    # ---- fold the cluster-membership gather into the adjacencies (A' = G @ A),
    # slot-major: member j of cluster c -> row j*Cpad + c.  Unfilled rows are 0.
    c0p = _align(n_c0, 8)
    c1p = _align(n_c1, 8)

    def fold(adj, seg_ids, n_seg, seg_pad):
        k = int(np.max(np.bincount(seg_ids, minlength=n_seg)))
        out = np.zeros((k * seg_pad, adj.shape[1]), np.float32)
        slot = np.zeros(n_seg, np.int64)
        for i, c in enumerate(seg_ids):
            out[slot[c] * seg_pad + c, :] = adj[i, :]
            slot[c] += 1
        return out, k

    a1p, k0 = fold(a1, c0, n_c0, c0p)                      # [K0*C0P, N]
    a2w = np.zeros((n_c0, c0p), np.float32)
    a2w[:, :n_c0] = a2
    a2p, k1 = fold(a2w, c1, n_c1, c1p)                     # [K1*C1P, C0P]

    # scatter_mean over batch as a [B, C1P] mean matrix (f32, padded cols = 0)
    m = np.zeros((num_graphs, c1p), np.float32)
    m[batch_pp, np.arange(n_c1)] = 1.0
    counts = np.maximum(m.sum(axis=1, keepdims=True), 1.0)
    m = m / counts

    return dict(
        # kernel-side (host-folded) structure
        A1P=a1p, A2P=a2p, M=m, C0P=c0p, C1P=c1p, K0=k0, K1=k1,
        # structural arrays for the pure-JAX reference path
        row=jnp.asarray(row, jnp.int32), col=jnp.asarray(col, jnp.int32),
        row_p=jnp.asarray(row_p, jnp.int32), col_p=jnp.asarray(col_p, jnp.int32),
        ea_p=jnp.asarray(ea_p),
        c0=jnp.asarray(c0, jnp.int32), c1=jnp.asarray(c1, jnp.int32),
        batch_pp=jnp.asarray(batch_pp, jnp.int32),
        C0=n_c0, C1=n_c1,
    )


# ----------------------------------------------------------------------------
# Pure-JAX reference.  Keeps the full attention / edge-attr path of the PyTorch
# module (softmax over a width-1 axis == 1.0 exactly).  bf16 rounding is applied
# at precisely the points where the kernel feeds the MXU bf16 operands, so the
# kernel-vs-reference residual is only f32 accumulation-order noise.
# ----------------------------------------------------------------------------

def ginet_forward_ref(params, x, edge_attr, prep, num_graphs):
    rb = lambda v: v.astype(jnp.bfloat16).astype(jnp.float32)
    ea0 = edge_attr.reshape(-1, 1)

    def conv(xn, row, col, ea, p, n_nodes):
        w = rb(p["w_fc"])
        xn_r = rb(xn)
        xcol = xn_r[col] @ w
        xrow = xn_r[row] @ w
        ed = ea @ p["w_edge"]
        alpha = jnp.concatenate([xrow, xcol, ed], axis=1) @ p["w_att"]
        alpha = jnp.where(alpha >= 0.0, alpha, 0.01 * alpha)    # leaky_relu
        alpha = jax.nn.softmax(alpha, axis=1)                   # width-1 -> 1.0
        h = rb(alpha * xcol)                                    # pre-scatter bf16 cast
        return jax.ops.segment_sum(h, row, num_segments=n_nodes)

    def branch(pa, pb):
        h = jax.nn.relu(conv(x, prep["row"], prep["col"], ea0, params[pa], x.shape[0]))
        p1 = jax.ops.segment_max(h, prep["c0"], num_segments=prep["C0"])
        h2 = jax.nn.relu(conv(p1, prep["row_p"], prep["col_p"], prep["ea_p"],
                              params[pb], prep["C0"]))
        p2 = jax.ops.segment_max(h2, prep["c1"], num_segments=prep["C1"])
        s = jax.ops.segment_sum(p2, prep["batch_pp"], num_segments=num_graphs)
        cnt = jax.ops.segment_sum(jnp.ones((p2.shape[0], 1), jnp.float32),
                                  prep["batch_pp"], num_segments=num_graphs)
        return s / jnp.maximum(cnt, 1.0)

    xi = branch("conv1", "conv2")
    xe = branch("conv1_ext", "conv2_ext")
    xcat = jnp.concatenate([xi, xe], axis=1)
    hid = jax.nn.relu(xcat @ params["fc"]["w1"] + params["fc"]["b1"])
    return hid @ params["fc"]["w2"] + params["fc"]["b2"]


# ----------------------------------------------------------------------------
# Parameters (deterministic init matching GINet.__init__ shapes; weights stored
# transposed from PyTorch so everything computes x @ W)
# ----------------------------------------------------------------------------

def _uniform(key, shape, bound):
    return jax.random.uniform(key, shape, jnp.float32, -bound, bound)


def init_conv_params(key, in_ch, out_ch, n_edge_feat=1):
    k1, k2, k3 = jax.random.split(key, 3)
    bound = 1.0 / np.sqrt(in_ch)
    return {
        "w_fc": _uniform(k1, (in_ch, out_ch), bound),                 # fc.weight.T
        "w_edge": _uniform(k2, (n_edge_feat, n_edge_feat), bound),    # fc_edge_attr.weight.T
        "w_att": _uniform(k3, (2 * out_ch + n_edge_feat, 1), bound),  # fc_attention.weight.T
    }


def init_ginet_params(key, input_shape, output_shape=1, input_shape_edge=1):
    keys = jax.random.split(key, 8)
    params = {
        "conv1": init_conv_params(keys[0], input_shape, 16, input_shape_edge),
        "conv2": init_conv_params(keys[1], 16, 32, input_shape_edge),
        "conv1_ext": init_conv_params(keys[2], input_shape, 16, input_shape_edge),
        "conv2_ext": init_conv_params(keys[3], 16, 32, input_shape_edge),
    }
    b1 = 1.0 / np.sqrt(2 * 32.0)
    b2 = 1.0 / np.sqrt(128.0)
    params["fc"] = {
        "w1": _uniform(keys[4], (2 * 32, 128), b1),
        "b1": _uniform(keys[5], (1, 128), b1),
        "w2": _uniform(keys[6], (128, output_shape), b2),
        "b2": _uniform(keys[7], (1, output_shape), b2),
    }
    return params


# ----------------------------------------------------------------------------
# Main
# ----------------------------------------------------------------------------

if __name__ == "__main__":
    key = jax.random.PRNGKey(0)
    num_graphs = 2
    nodes_per_graph = 12
    edges_per_graph = 20
    fin = 8                                    # GINet(input_shape=8)

    n = num_graphs * nodes_per_graph
    e = num_graphs * edges_per_graph

    k_x, k_r, k_c, k_ea, k_p = jax.random.split(key, 5)
    x = jax.random.normal(k_x, (n, fin), jnp.float32)
    local_row = jax.random.randint(k_r, (num_graphs, edges_per_graph), 0, nodes_per_graph)
    local_col = jax.random.randint(k_c, (num_graphs, edges_per_graph), 0, nodes_per_graph)
    offs = (jnp.arange(num_graphs) * nodes_per_graph)[:, None]
    row = (local_row + offs).reshape(-1).astype(jnp.int32)
    col = (local_col + offs).reshape(-1).astype(jnp.int32)
    edge_attr = jax.random.uniform(k_ea, (e,), jnp.float32)
    batch = jnp.repeat(jnp.arange(num_graphs, dtype=jnp.int32), nodes_per_graph)
    # preloaded (MCL) cluster assignments: pairs of nodes / pairs of communities
    cluster0 = jnp.tile(jnp.arange(nodes_per_graph, dtype=jnp.int32) // 2, num_graphs)
    cluster1 = jnp.tile(jnp.arange(nodes_per_graph // 2, dtype=jnp.int32) // 2, num_graphs)

    prep = precompute_structure(row, col, edge_attr, batch, cluster0, cluster1, num_graphs)
    params = init_ginet_params(k_p, input_shape=fin, output_shape=1, input_shape_edge=1)

    out = jax.block_until_ready(ginet_forward_pallas(params, x, prep))
    ref = jax.block_until_ready(ginet_forward_ref(params, x, edge_attr, prep, num_graphs))
    # Reference applies identical bf16 rounding points -> residual is only f32
    # accumulation-order noise; tolerance is generous for safety.
    np.testing.assert_allclose(np.asarray(out), np.asarray(ref), rtol=1e-2, atol=1e-2)
    print("KERNEL_OK")
</pallas_src>

<mosaic_0001>
module attributes {stable_mosaic.version = 11 : i64} {
  func.func @kernel(%arg0: i32, %arg1: memref<24x8xf32, #tpu.memory_space<vmem>>, %arg2: memref<96x64xbf16, #tpu.memory_space<vmem>>, %arg3: memref<216x128xf32, #tpu.memory_space<vmem>>, %arg4: memref<2x1xf32, #tpu.memory_space<vmem>>) attributes {dimension_semantics = [#tpu.dimension_semantics<arbitrary>], iteration_bounds = array<i64: 1>, scalar_prefetch = 0 : i64, scratch_operands = 0 : i64, tpu.core_type = #tpu.core_type<tc>, window_params = [{pipeline_mode = #tpu.pipeline_mode<synchronous>, transform_indices = @transform_0, window_bounds = array<i64: 24, 8>}, {pipeline_mode = #tpu.pipeline_mode<synchronous>, transform_indices = @transform_1, window_bounds = array<i64: 96, 64>}, {pipeline_mode = #tpu.pipeline_mode<synchronous>, transform_indices = @transform_2, window_bounds = array<i64: 216, 128>}, {pipeline_mode = #tpu.pipeline_mode<synchronous>, transform_indices = @transform_3, window_bounds = array<i64: 2, 1>}]} {
    %c0 = arith.constant 0 : index
    %c0_0 = arith.constant 0 : index
    %0 = vector.load %arg1[%c0, %c0_0] : memref<24x8xf32, #tpu.memory_space<vmem>>, vector<24x8xf32>
    %1 = arith.truncf %0 : vector<24x8xf32> to vector<24x8xbf16>
    %c0_1 = arith.constant 0 : index
    %c0_2 = arith.constant 0 : index
    %2 = vector.load %arg2[%c0_1, %c0_2] : memref<96x64xbf16, #tpu.memory_space<vmem>>, vector<32x24xbf16>
    %c32 = arith.constant 32 : index
    %c0_3 = arith.constant 0 : index
    %3 = vector.load %arg2[%c32, %c0_3] : memref<96x64xbf16, #tpu.memory_space<vmem>>, vector<16x16xbf16>
    %c48 = arith.constant 48 : index
    %c0_4 = arith.constant 0 : index
    %4 = vector.load %arg2[%c48, %c0_4] : memref<96x64xbf16, #tpu.memory_space<vmem>>, vector<8x32xbf16>
    %c64 = arith.constant 64 : index
    %c0_5 = arith.constant 0 : index
    %5 = vector.load %arg2[%c64, %c0_5] : memref<96x64xbf16, #tpu.memory_space<vmem>>, vector<32x64xbf16>
    %cst = arith.constant dense<0.000000e+00> : vector<24x32xf32>
    %6 = tpu.matmul %1, %4, %cst {dimension_numbers = #tpu.dot_dimension_numbers<[1], [0], [0], [1], [0, 0, 1, 1], [], []>} : vector<24x8xbf16>, vector<8x32xbf16>, vector<24x32xf32> -> vector<24x32xf32>
    %7 = arith.truncf %6 : vector<24x32xf32> to vector<24x32xbf16>
    %cst_6 = arith.constant dense<0.000000e+00> : vector<32x32xf32>
    %8 = tpu.matmul %2, %7, %cst_6 {dimension_numbers = #tpu.dot_dimension_numbers<[1], [0], [0], [1], [0, 0, 1, 1], [], []>} : vector<32x24xbf16>, vector<24x32xbf16>, vector<32x32xf32> -> vector<32x32xf32>
    %cst_7 = arith.constant 0.000000e+00 : f32
    %9 = vector.broadcast %cst_7 : f32 to vector<32x32xf32>
    %10 = arith.maximumf %8, %9 : vector<32x32xf32>
    %11 = vector.extract_strided_slice %10 {offsets = [0, 0], sizes = [16, 32], strides = [1, 1]} : vector<32x32xf32> to vector<16x32xf32>
    %12 = vector.extract_strided_slice %10 {offsets = [16, 0], sizes = [16, 32], strides = [1, 1]} : vector<32x32xf32> to vector<16x32xf32>
    %13 = arith.maximumf %11, %12 : vector<16x32xf32>
    %14 = arith.truncf %13 : vector<16x32xf32> to vector<16x32xbf16>
    %cst_8 = arith.constant dense<0.000000e+00> : vector<16x64xf32>
    %15 = tpu.matmul %14, %5, %cst_8 {dimension_numbers = #tpu.dot_dimension_numbers<[1], [0], [0], [1], [0, 0, 1, 1], [], []>} : vector<16x32xbf16>, vector<32x64xbf16>, vector<16x64xf32> -> vector<16x64xf32>
    %16 = arith.truncf %15 : vector<16x64xf32> to vector<16x64xbf16>
    %cst_9 = arith.constant dense<0.000000e+00> : vector<16x64xf32>
    %17 = tpu.matmul %3, %16, %cst_9 {dimension_numbers = #tpu.dot_dimension_numbers<[1], [0], [0], [1], [0, 0, 1, 1], [], []>} : vector<16x16xbf16>, vector<16x64xbf16>, vector<16x64xf32> -> vector<16x64xf32>
    %cst_10 = arith.constant 0.000000e+00 : f32
    %18 = vector.broadcast %cst_10 : f32 to vector<16x64xf32>
    %19 = arith.maximumf %17, %18 : vector<16x64xf32>
    %20 = vector.extract_strided_slice %19 {offsets = [0, 0], sizes = [8, 64], strides = [1, 1]} : vector<16x64xf32> to vector<8x64xf32>
    %21 = vector.extract_strided_slice %19 {offsets = [8, 0], sizes = [8, 64], strides = [1, 1]} : vector<16x64xf32> to vector<8x64xf32>
    %22 = arith.maximumf %20, %21 : vector<8x64xf32>
    %c208 = arith.constant 208 : index
    %c0_11 = arith.constant 0 : index
    %23 = vector.load %arg3[%c208, %c0_11] : memref<216x128xf32, #tpu.memory_space<vmem>>, vector<2x8xf32>
    %cst_12 = arith.constant dense<0.000000e+00> : vector<2x64xf32>
    %24 = tpu.matmul %23, %22, %cst_12 {dimension_numbers = #tpu.dot_dimension_numbers<[1], [0], [0], [1], [0, 0, 1, 1], [], []>} : vector<2x8xf32>, vector<8x64xf32>, vector<2x64xf32> -> vector<2x64xf32>
    %c0_13 = arith.constant 0 : index
    %c0_14 = arith.constant 0 : index
    %25 = vector.load %arg3[%c0_13, %c0_14] : memref<216x128xf32, #tpu.memory_space<vmem>>, vector<64x128xf32>
    %c64_15 = arith.constant 64 : index
    %c0_16 = arith.constant 0 : index
    %26 = vector.load %arg3[%c64_15, %c0_16] : memref<216x128xf32, #tpu.memory_space<vmem>>, vector<1x128xf32>
    %c72 = arith.constant 72 : index
    %c0_17 = arith.constant 0 : index
    %27 = vector.load %arg3[%c72, %c0_17] : memref<216x128xf32, #tpu.memory_space<vmem>>, vector<128x1xf32>
    %c200 = arith.constant 200 : index
    %c0_18 = arith.constant 0 : index
    %28 = vector.load %arg3[%c200, %c0_18] : memref<216x128xf32, #tpu.memory_space<vmem>>, vector<1x1xf32>
    %cst_19 = arith.constant dense<0.000000e+00> : vector<2x128xf32>
    %29 = tpu.matmul %24, %25, %cst_19 {dimension_numbers = #tpu.dot_dimension_numbers<[1], [0], [0], [1], [0, 0, 1, 1], [], []>} : vector<2x64xf32>, vector<64x128xf32>, vector<2x128xf32> -> vector<2x128xf32>
    %30 = vector.broadcast %26 : vector<1x128xf32> to vector<2x128xf32>
    %31 = arith.addf %29, %30 : vector<2x128xf32>
    %cst_20 = arith.constant 0.000000e+00 : f32
    %32 = vector.broadcast %cst_20 : f32 to vector<2x128xf32>
    %33 = arith.maximumf %31, %32 : vector<2x128xf32>
    %cst_21 = arith.constant dense<0.000000e+00> : vector<2x1xf32>
    %34 = tpu.matmul %33, %27, %cst_21 {dimension_numbers = #tpu.dot_dimension_numbers<[1], [0], [0], [1], [0, 0, 1, 1], [], []>} : vector<2x128xf32>, vector<128x1xf32>, vector<2x1xf32> -> vector<2x1xf32>
    %35 = vector.broadcast %28 : vector<1x1xf32> to vector<2x1xf32>
    %36 = arith.addf %34, %35 : vector<2x1xf32>
    %c0_22 = arith.constant 0 : index
    %c0_23 = arith.constant 0 : index
    %37 = vector.load %arg4[%c0_22, %c0_23] : memref<2x1xf32, #tpu.memory_space<vmem>>, vector<2x1xf32>
    tpu.vector_store %arg4[%c0_22, %c0_23], %36 {strides = array<i32>} : memref<2x1xf32, #tpu.memory_space<vmem>>, vector<2x1xf32>,
    return
  }
  func.func @transform_0(%arg0: i32) -> (i32, i32) {
    %c0_i32 = arith.constant 0 : i32
    %c0_i32_0 = arith.constant 0 : i32
    %c0_i32_1 = arith.constant 0 : i32
    return %c0_i32, %c0_i32_0 : i32, i32
  }
  func.func @transform_1(%arg0: i32) -> (i32, i32) {
    %c0_i32 = arith.constant 0 : i32
    %c0_i32_0 = arith.constant 0 : i32
    %c0_i32_1 = arith.constant 0 : i32
    return %c0_i32, %c0_i32_0 : i32, i32
  }
  func.func @transform_2(%arg0: i32) -> (i32, i32) {
    %c0_i32 = arith.constant 0 : i32
    %c0_i32_0 = arith.constant 0 : i32
    %c0_i32_1 = arith.constant 0 : i32
    return %c0_i32, %c0_i32_0 : i32, i32
  }
  func.func @transform_3(%arg0: i32) -> (i32, i32) {
    %c0_i32 = arith.constant 0 : i32
    %c0_i32_0 = arith.constant 0 : i32
    %c0_i32_1 = arith.constant 0 : i32
    return %c0_i32, %c0_i32_0 : i32, i32
  }
}

</mosaic_0001>

<llo_original>
// kernel: tpu_custom_call.1
$region0: #{tpu_custom_call.1}
  #allocation0 [shape = 'u32[]', space=smem, size = 0x4, offset = 0x4, fixed_abs, tag = 'smem constant byte address 0x4 - core index']
  #allocation1 [shape = 'u32[144,128]{1,0:T(1,128)}', space=vmem, size = 0x12000, scoped, tag = 'internal scratch']
  %s0 = inlined_call_operand.vmem [shape: f32[24,8], index: 0, kind: input, shape index: {}]
  %s1 = inlined_call_operand.vmem [shape: bf16[96,64], index: 1, kind: input, shape index: {}]
  %s2 = inlined_call_operand.hbm [shape: f32[216,128], index: 2, kind: input, shape index: {}]
  %s3 = inlined_call_operand.vmem [shape: f32[2,1], index: 3, kind: output, shape index: {}]
  %s4 = sld [smem:[#allocation0]]
  $region26: #{tpu_custom_call.1} parent=0
    _
  %s6 = ssub.s32 1, %s4
  %s7 = scalar_select 0, %s6, %s4
  $region1: #{tpu_custom_call.1} parent=0
    #allocation2 [shape = 'u8[110592]{0}', space=vmem, size = 0x1b000, scoped, tag = 'input window, operand 2, single buffered']
    #allocation3 [shape = 's32[1]{0}', space=sflag, size = 0x4, scoped, tag = 'scoped memory for tpu_custom_call.1']
    %8 = vsyncpa [#allocation3], 0
    // Predicated region
    $region2: #{tpu_custom_call.1} parent=1 // pred_check
      _
    $region3: #{tpu_custom_call.1} parent=1 // pred_check_branch
      %10 = sbr.rel (0) target = $region5
    $region4: #{tpu_custom_call.1} parent=1 // pred_region
      _
    $region5: #{tpu_custom_call.1} parent=1 // pred_fallthru
      _
    // Predicated region
    $region6: #{tpu_custom_call.1} parent=1 // pred_check
      _
    $region7: #{tpu_custom_call.1} parent=1 // pred_check_branch
      %12 = sbr.rel (0) target = $region9
    $region8: #{tpu_custom_call.1} parent=1 // pred_region
      _
    $region9: #{tpu_custom_call.1} parent=1 // pred_fallthru
      _
    // Predicated region
    $region10: #{tpu_custom_call.1} parent=1 // pred_check
      _
    $region11: #{tpu_custom_call.1} parent=1 // pred_check_branch
      %14 = sbr.rel (0) target = $region13
    $region12: #{tpu_custom_call.1} parent=1 // pred_region
      %s16 = ssub.s32 3456, 3456
      %17 = vsyncadd [#allocation3], %s16
      %s18 = sshll.u32 [#allocation2], 4
      %s19 = int_to_ptr.vmem [resolvable:$true] %s18
      %24 = dma.hbm_to_vmem [thread:$0]  %s2, 3456, %s19, [#allocation3], 128, 128, 8
    $region13: #{tpu_custom_call.1} parent=1 // pred_fallthru
      _
    // Predicated region
    $region14: #{tpu_custom_call.1} parent=1 // pred_check
      _
    $region15: #{tpu_custom_call.1} parent=1 // pred_check_branch
      %26 = sbr.rel (0) target = $region17
    $region16: #{tpu_custom_call.1} parent=1 // pred_region
      %27 = dma.done [#allocation3], 3456
    $region17: #{tpu_custom_call.1} parent=1 // pred_fallthru
      _
    %v29 = vld [vmem:[%s0] sm:$0xff]
    %v30 = vld [vmem:[%s0 + $0x8] sm:$0xff]
    %v31 = vld [vmem:[%s0 + $0x10] sm:$0xff]
    %v32 = vpack.c.bf16 %v30, %v29
    %v33 = vpack.c.bf16 %v31, %v31
    %v34 = vld [vmem:[%s1] sm:$0xf]
    %v35 = vld [vmem:[%s1 + $0x4] sm:$0xf]
    %v36 = vld [vmem:[%s1 + $0x8] sm:$0xf]
    %v37 = vld [vmem:[%s1 + $0xc] sm:$0xf]
    %v38 = vld [vmem:[%s1 + $0x10] sm:$0xf]
    %v39 = vld [vmem:[%s1 + $0x14] sm:$0xf]
    %v40 = vld [vmem:[%s1 + $0x18] sm:$0xf]
    %v41 = vld [vmem:[%s1 + $0x20] sm:$0xf]
    %v42 = vld [vmem:[%s1 + $0x24] sm:$0xf]
    %v43 = vld [vmem:[%s1 + $0x28] sm:$0xf]
    %v44 = vld [vmem:[%s1 + $0x2c] sm:$0xf]
    %vm45 = vcmask 64512
    %v47 = vsel %vm45, %v32, 0
    %v50 = vsel %vm45, %v33, 0
    %vm52 = vcmask 1043456
    %v54 = vsel %vm52, %v40, 0
    %56 = vmatprep.subr.bf16.mxu0 0
    %57 = vmatpush1.bf16.msra.mxu0 %v54
    %58 = vmatprep.subr.bf16.mxu0 0
    %59 = vmatpush1.bf16.msra.mxu0 0
    %60 = vmatprep.subr.bf16.mxu0 0
    %61 = vmatpush1.bf16.msra.mxu0 0
    %62 = vmatprep.subr.bf16.mxu0 0
    %63 = vmatpush1.bf16.msra.mxu0 0
    %64 = vmatprep.subr.bf16.mxu0 0
    %65 = vmatpush1.bf16.msra.mxu0 0
    %66 = vmatprep.subr.bf16.mxu0 0
    %67 = vmatpush1.bf16.msra.mxu0 0
    %68 = vmatprep.subr.bf16.mxu0 0
    %69 = vmatpush1.bf16.msra.mxu0 0
    %70 = vmatprep.subr.bf16.mxu0 0
    %71 = vmatpush1.bf16.msra.mxu0 0
    %72 = vmatprep.subr.bf16.mxu0 0
    %73 = vmatpush1.bf16.msra.mxu0 0
    %74 = vmatprep.subr.bf16.mxu0 0
    %75 = vmatpush1.bf16.msra.mxu0 0
    %76 = vmatprep.subr.bf16.mxu0 0
    %77 = vmatpush1.bf16.msra.mxu0 0
    %78 = vmatprep.subr.bf16.mxu0 0
    %79 = vmatpush1.bf16.msra.mxu0 0
    %80 = vmatprep.subr.bf16.mxu0 0
    %81 = vmatpush1.bf16.msra.mxu0 0
    %82 = vmatprep.subr.bf16.mxu0 0
    %83 = vmatpush1.bf16.msra.mxu0 0
    %84 = vmatprep.subr.bf16.mxu0 0
    %85 = vmatpush1.bf16.msra.mxu0 0
    %86 = vmatprep.subr.bf16.mxu0 0
    %87 = vmatpush1.bf16.msra.mxu0 0
    %88 = vmatprep.mubr.bf16.mxu0 0
    %89 = vmatmul.mubr.bf16.gmra.mrb[0].mxu0 %v47
    %v90 = vpop.f32.mrb[0].mxu0
    %v91 = vadd.f32 0.0, %v90
    %v92 = vpop.f32.mrb[0].mxu0
    %v93 = vpop.f32.mrb[0].mxu0
    %v94 = vadd.f32 0.0, %v93
    %v95 = vpop.f32.mrb[0].mxu0
    %96 = vmatprep.mubr.bf16.mxu0 0
    %97 = vmatmul.mubr.bf16.gmra.mrb[0].mxu0 %v50
    %v98 = vpop.f32.mrb[0].mxu0
    %v99 = vadd.f32 0.0, %v98
    %v100 = vpop.f32.mrb[0].mxu0
    %v101 = vpop.f32.mrb[0].mxu0
    %v102 = vpop.f32.mrb[0].mxu0
    %103 = vdwg.mxu0
    %v104 = vpack.c.bf16 %v94, %v91
    %v105 = vpack.c.bf16 %v99, %v99
    %v110 = vunpack.c.l.b16 %v34
    %v111 = vunpack.c.l.b16 %v35
    %v112 = vunpack.c.l.b16 %v36
    %v113 = vunpack.c.l.b16 %v37
    %v114 = vpack.c.b16 %v111, %v110
    %v115 = vpack.c.b16 %v113, %v112
    %vm116 = vcmask 195584
    %v118 = vsel %vm116, %v114, 0
    %v121 = vsel %vm116, %v115, 0
    %v124 = vsel %vm52, %v105, 0
    %126 = vmatprep.subr.bf16.mxu0 0
    %127 = vmatpush1.bf16.msra.mxu0 %v104
    %128 = vmatprep.subr.bf16.mxu0 0
    %129 = vmatpush1.bf16.msra.mxu0 %v124
    %130 = vmatprep.subr.bf16.mxu0 0
    %131 = vmatpush1.bf16.msra.mxu0 0
    %132 = vmatprep.subr.bf16.mxu0 0
    %133 = vmatpush1.bf16.msra.mxu0 0
    %134 = vmatprep.subr.bf16.mxu0 0
    %135 = vmatpush1.bf16.msra.mxu0 0
    %136 = vmatprep.subr.bf16.mxu0 0
    %137 = vmatpush1.bf16.msra.mxu0 0
    %138 = vmatprep.subr.bf16.mxu0 0
    %139 = vmatpush1.bf16.msra.mxu0 0
    %140 = vmatprep.subr.bf16.mxu0 0
    %141 = vmatpush1.bf16.msra.mxu0 0
    %142 = vmatprep.subr.bf16.mxu0 0
    %143 = vmatpush1.bf16.msra.mxu0 0
    %144 = vmatprep.subr.bf16.mxu0 0
    %145 = vmatpush1.bf16.msra.mxu0 0
    %146 = vmatprep.subr.bf16.mxu0 0
    %147 = vmatpush1.bf16.msra.mxu0 0
    %148 = vmatprep.subr.bf16.mxu0 0
    %149 = vmatpush1.bf16.msra.mxu0 0
    %150 = vmatprep.subr.bf16.mxu0 0
    %151 = vmatpush1.bf16.msra.mxu0 0
    %152 = vmatprep.subr.bf16.mxu0 0
    %153 = vmatpush1.bf16.msra.mxu0 0
    %154 = vmatprep.subr.bf16.mxu0 0
    %155 = vmatpush1.bf16.msra.mxu0 0
    %156 = vmatprep.subr.bf16.mxu0 0
    %157 = vmatpush1.bf16.msra.mxu0 0
    %158 = vmatprep.mubr.bf16.mxu0 0
    %159 = vmatmul.mubr.bf16.gmra.mrb[0].mxu0 %v118
    %v160 = vpop.f32.mrb[0].mxu0
    %v161 = vadd.f32 0.0, %v160
    %v162 = vpop.f32.mrb[0].mxu0
    %v163 = vpop.f32.mrb[0].mxu0
    %v164 = vadd.f32 0.0, %v163
    %v165 = vpop.f32.mrb[0].mxu0
    %166 = vmatprep.mubr.bf16.mxu0 0
    %167 = vmatmul.mubr.bf16.gmra.mrb[0].mxu0 %v121
    %v168 = vpop.f32.mrb[0].mxu0
    %v169 = vadd.f32 0.0, %v168
    %v170 = vpop.f32.mrb[0].mxu0
    %v171 = vpop.f32.mrb[0].mxu0
    %v172 = vadd.f32 0.0, %v171
    %v173 = vpop.f32.mrb[0].mxu0
    %174 = vdwg.mxu0
    %v175 = vmax.f32 %v161, 0.0
    %v176 = vmax.f32 %v164, 0.0
    %v177 = vmax.f32 %v169, 0.0
    %v178 = vmax.f32 %v172, 0.0
    %v179 = vmax.f32 %v175, %v177
    %v180 = vmax.f32 %v176, %v178
    %v181 = vpack.c.bf16 %v180, %v179
    %v186 = vunpack.c.l.b16 %v41
    %v187 = vunpack.c.l.b16 %v42
    %v188 = vunpack.c.l.b16 %v43
    %v189 = vunpack.c.l.b16 %v44
    %v190 = vpack.c.b16 %v187, %v186
    %v191 = vpack.c.b16 %v189, %v188
    %vm194 = vcmask 261120
    %v196 = vsel %vm194, %v181, 0
    %198 = vmatprep.subr.bf16.mxu0 0
    %199 = vmatpush1.bf16.msra.mxu0 %v190
    %200 = vmatprep.subr.bf16.mxu0 0
    %201 = vmatpush1.bf16.msra.mxu0 %v191
    %202 = vmatprep.subr.bf16.mxu0 0
    %203 = vmatpush1.bf16.msra.mxu0 0
    %204 = vmatprep.subr.bf16.mxu0 0
    %205 = vmatpush1.bf16.msra.mxu0 0
    %206 = vmatprep.subr.bf16.mxu0 0
    %207 = vmatpush1.bf16.msra.mxu0 0
    %208 = vmatprep.subr.bf16.mxu0 0
    %209 = vmatpush1.bf16.msra.mxu0 0
    %210 = vmatprep.subr.bf16.mxu0 0
    %211 = vmatpush1.bf16.msra.mxu0 0
    %212 = vmatprep.subr.bf16.mxu0 0
    %213 = vmatpush1.bf16.msra.mxu0 0
    %214 = vmatprep.subr.bf16.mxu0 0
    %215 = vmatpush1.bf16.msra.mxu0 0
    %216 = vmatprep.subr.bf16.mxu0 0
    %217 = vmatpush1.bf16.msra.mxu0 0
    %218 = vmatprep.subr.bf16.mxu0 0
    %219 = vmatpush1.bf16.msra.mxu0 0
    %220 = vmatprep.subr.bf16.mxu0 0
    %221 = vmatpush1.bf16.msra.mxu0 0
    %222 = vmatprep.subr.bf16.mxu0 0
    %223 = vmatpush1.bf16.msra.mxu0 0
    %224 = vmatprep.subr.bf16.mxu0 0
    %225 = vmatpush1.bf16.msra.mxu0 0
    %226 = vmatprep.subr.bf16.mxu0 0
    %227 = vmatpush1.bf16.msra.mxu0 0
    %228 = vmatprep.subr.bf16.mxu0 0
    %229 = vmatpush1.bf16.msra.mxu0 0
    %230 = vmatprep.mubr.bf16.mxu0 0
    %231 = vmatmul.mubr.bf16.gmra.mrb[0].mxu0 %v196
    %v232 = vpop.f32.mrb[0].mxu0
    %v233 = vadd.f32 0.0, %v232
    %v234 = vpop.f32.mrb[0].mxu0
    %v235 = vpop.f32.mrb[0].mxu0
    %v236 = vadd.f32 0.0, %v235
    %v237 = vpop.f32.mrb[0].mxu0
    %238 = vdwg.mxu0
    %v239 = vpack.c.bf16 %v236, %v233
    %v242 = vunpack.c.l.b16 %v38
    %v243 = vunpack.c.l.b16 %v39
    %v244 = vpack.c.b16 %v243, %v242
    %vm245 = vcmask 130048
    %v247 = vsel %vm245, %v244, 0
    %249 = vmatprep.subr.bf16.mxu0 0
    %250 = vmatpush1.bf16.msra.mxu0 %v239
    %251 = vmatprep.subr.bf16.mxu0 0
    %252 = vmatpush1.bf16.msra.mxu0 0
    %253 = vmatprep.subr.bf16.mxu0 0
    %254 = vmatpush1.bf16.msra.mxu0 0
    %255 = vmatprep.subr.bf16.mxu0 0
    %256 = vmatpush1.bf16.msra.mxu0 0
    %257 = vmatprep.subr.bf16.mxu0 0
    %258 = vmatpush1.bf16.msra.mxu0 0
    %259 = vmatprep.subr.bf16.mxu0 0
    %260 = vmatpush1.bf16.msra.mxu0 0
    %261 = vmatprep.subr.bf16.mxu0 0
    %262 = vmatpush1.bf16.msra.mxu0 0
    %263 = vmatprep.subr.bf16.mxu0 0
    %264 = vmatpush1.bf16.msra.mxu0 0
    %265 = vmatprep.subr.bf16.mxu0 0
    %266 = vmatpush1.bf16.msra.mxu0 0
    %267 = vmatprep.subr.bf16.mxu0 0
    %268 = vmatpush1.bf16.msra.mxu0 0
    %269 = vmatprep.subr.bf16.mxu0 0
    %270 = vmatpush1.bf16.msra.mxu0 0
    %271 = vmatprep.subr.bf16.mxu0 0
    %272 = vmatpush1.bf16.msra.mxu0 0
    %273 = vmatprep.subr.bf16.mxu0 0
    %274 = vmatpush1.bf16.msra.mxu0 0
    %275 = vmatprep.subr.bf16.mxu0 0
    %276 = vmatpush1.bf16.msra.mxu0 0
    %277 = vmatprep.subr.bf16.mxu0 0
    %278 = vmatpush1.bf16.msra.mxu0 0
    %279 = vmatprep.subr.bf16.mxu0 0
    %280 = vmatpush1.bf16.msra.mxu0 0
    %281 = vmatprep.mubr.bf16.mxu0 0
    %282 = vmatmul.mubr.bf16.gmra.mrb[0].mxu0 %v247
    %v283 = vpop.f32.mrb[0].mxu0
    %v284 = vadd.f32 0.0, %v283
    %v285 = vpop.f32.mrb[0].mxu0
    %v286 = vpop.f32.mrb[0].mxu0
    %v287 = vadd.f32 0.0, %v286
    %v288 = vpop.f32.mrb[0].mxu0
    %289 = vdwg.mxu0
    %v290 = vmax.f32 %v284, 0.0
    %v291 = vmax.f32 %v287, 0.0
    %v292 = vmax.f32 %v290, %v291
    %v293 = vld [vmem:[#allocation2 + $0xd0] sm:$0x3]
    %v295 = vsel %vm45, %v293, 0
    %297 = vmatprep.subr.mxu0 0.0
    %298 = vmatpush1.msra.mxu0 %v292
    %299 = vmatprep.subr.mxu0 0.0
    %300 = vmatpush1.msra.mxu0 0.0
    %301 = vmatprep.subr.mxu0 0.0
    %302 = vmatpush1.msra.mxu0 0.0
    %303 = vmatprep.subr.mxu0 0.0
    %304 = vmatpush1.msra.mxu0 0.0
    %305 = vmatprep.subr.mxu0 0.0
    %306 = vmatpush1.msra.mxu0 0.0
    %307 = vmatprep.subr.mxu0 0.0
    %308 = vmatpush1.msra.mxu0 0.0
    %309 = vmatprep.subr.mxu0 0.0
    %310 = vmatpush1.msra.mxu0 0.0
    %311 = vmatprep.subr.mxu0 0.0
    %312 = vmatpush1.msra.mxu0 0.0
    %313 = vmatprep.subr.mxu0 0.0
    %314 = vmatpush1.msra.mxu0 0.0
    %315 = vmatprep.subr.mxu0 0.0
    %316 = vmatpush1.msra.mxu0 0.0
    %317 = vmatprep.subr.mxu0 0.0
    %318 = vmatpush1.msra.mxu0 0.0
    %319 = vmatprep.subr.mxu0 0.0
    %320 = vmatpush1.msra.mxu0 0.0
    %321 = vmatprep.subr.mxu0 0.0
    %322 = vmatpush1.msra.mxu0 0.0
    %323 = vmatprep.subr.mxu0 0.0
    %324 = vmatpush1.msra.mxu0 0.0
    %325 = vmatprep.subr.mxu0 0.0
    %326 = vmatpush1.msra.mxu0 0.0
    %327 = vmatprep.subr.mxu0 0.0
    %328 = vmatpush1.msra.mxu0 0.0
    %329 = vmatprep.subr.mxu0 0.0
    %330 = vmatpush1.msra.mxu0 0.0
    %331 = vmatprep.subr.mxu0 0.0
    %332 = vmatpush1.msra.mxu0 0.0
    %333 = vmatprep.subr.mxu0 0.0
    %334 = vmatpush1.msra.mxu0 0.0
    %335 = vmatprep.subr.mxu0 0.0
    %336 = vmatpush1.msra.mxu0 0.0
    %337 = vmatprep.subr.mxu0 0.0
    %338 = vmatpush1.msra.mxu0 0.0
    %339 = vmatprep.subr.mxu0 0.0
    %340 = vmatpush1.msra.mxu0 0.0
    %341 = vmatprep.subr.mxu0 0.0
    %342 = vmatpush1.msra.mxu0 0.0
    %343 = vmatprep.subr.mxu0 0.0
    %344 = vmatpush1.msra.mxu0 0.0
    %345 = vmatprep.subr.mxu0 0.0
    %346 = vmatpush1.msra.mxu0 0.0
    %347 = vmatprep.subr.mxu0 0.0
    %348 = vmatpush1.msra.mxu0 0.0
    %349 = vmatprep.subr.mxu0 0.0
    %350 = vmatpush1.msra.mxu0 0.0
    %351 = vmatprep.subr.mxu0 0.0
    %352 = vmatpush1.msra.mxu0 0.0
    %353 = vmatprep.subr.mxu0 0.0
    %354 = vmatpush1.msra.mxu0 0.0
    %355 = vmatprep.subr.mxu0 0.0
    %356 = vmatpush1.msra.mxu0 0.0
    %357 = vmatprep.subr.mxu0 0.0
    %358 = vmatpush1.msra.mxu0 0.0
    %359 = vmatprep.subr.mxu0 0.0
    %360 = vmatpush1.msra.mxu0 0.0
    %361 = vmatprep.mubr.f32.mxu0 0.0
    %362 = vmatmul.mubr.f32.gmra.mrb[0].mxu0 %v295
    %v363 = vpop.f32.mrb[0].mxu0
    %v364 = vadd.f32 0.0, %v363
    %v365 = vpop.f32.mrb[0].mxu0
    %366 = vdwg.mxu0
    %v367 = vld [vmem:[#allocation2] sm:$0xff]
    %v368 = vld [vmem:[#allocation2 + $0x8] sm:$0xff]
    %v369 = vld [vmem:[#allocation2 + $0x10] sm:$0xff]
    %v370 = vld [vmem:[#allocation2 + $0x18] sm:$0xff]
    %v371 = vld [vmem:[#allocation2 + $0x20] sm:$0xff]
    %v372 = vld [vmem:[#allocation2 + $0x28] sm:$0xff]
    %v373 = vld [vmem:[#allocation2 + $0x30] sm:$0xff]
    %v374 = vld [vmem:[#allocation2 + $0x38] sm:$0xff]
    %v375 = vld [vmem:[#allocation2 + $0x40] sm:$0x1]
    %v376 = vld [vmem:[#allocation2 + $0x48] sm:$0xff]
    %v377 = vld [vmem:[#allocation2 + $0x50] sm:$0xff]
    %v378 = vld [vmem:[#allocation2 + $0x58] sm:$0xff]
    %v379 = vld [vmem:[#allocation2 + $0x60] sm:$0xff]
    %v380 = vld [vmem:[#allocation2 + $0x68] sm:$0xff]
    %v381 = vld [vmem:[#allocation2 + $0x70] sm:$0xff]
    %v382 = vld [vmem:[#allocation2 + $0x78] sm:$0xff]
    %v383 = vld [vmem:[#allocation2 + $0x80] sm:$0xff]
    %v384 = vld [vmem:[#allocation2 + $0x88] sm:$0xff]
    %v385 = vld [vmem:[#allocation2 + $0x90] sm:$0xff]
    %v386 = vld [vmem:[#allocation2 + $0x98] sm:$0xff]
    %v387 = vld [vmem:[#allocation2 + $0xa0] sm:$0xff]
    %v388 = vld [vmem:[#allocation2 + $0xa8] sm:$0xff]
    %v389 = vld [vmem:[#allocation2 + $0xb0] sm:$0xff]
    %v390 = vld [vmem:[#allocation2 + $0xb8] sm:$0xff]
    %v391 = vld [vmem:[#allocation2 + $0xc0] sm:$0xff]
    %v392 = vld [vmem:[#allocation2 + $0xc8] sm:$0x1]
    %v393 = vlaneseq
    %v394 = vshrl.u32 %v393, 7
    %v395 = vsub.s32 0, %v394
    %v396 = vrot.slane %v375, %v395
    %vm397 = vcmask 523264
    %v399 = vsel %vm397, %v364, 0
    %401 = vmatprep.subr.mxu0 0.0
    %402 = vmatpush1.msra.mxu0 %v367
    %403 = vmatprep.subr.mxu0 0.0
    %404 = vmatpush1.msra.mxu0 %v368
    %405 = vmatprep.subr.mxu0 0.0
    %406 = vmatpush1.msra.mxu0 %v369
    %407 = vmatprep.subr.mxu0 0.0
    %408 = vmatpush1.msra.mxu0 %v370
    %409 = vmatprep.subr.mxu0 0.0
    %410 = vmatpush1.msra.mxu0 %v371
    %411 = vmatprep.subr.mxu0 0.0
    %412 = vmatpush1.msra.mxu0 %v372
    %413 = vmatprep.subr.mxu0 0.0
    %414 = vmatpush1.msra.mxu0 %v373
    %415 = vmatprep.subr.mxu0 0.0
    %416 = vmatpush1.msra.mxu0 %v374
    %417 = vmatprep.subr.mxu0 0.0
    %418 = vmatpush1.msra.mxu0 0.0
    %419 = vmatprep.subr.mxu0 0.0
    %420 = vmatpush1.msra.mxu0 0.0
    %421 = vmatprep.subr.mxu0 0.0
    %422 = vmatpush1.msra.mxu0 0.0
    %423 = vmatprep.subr.mxu0 0.0
    %424 = vmatpush1.msra.mxu0 0.0
    %425 = vmatprep.subr.mxu0 0.0
    %426 = vmatpush1.msra.mxu0 0.0
    %427 = vmatprep.subr.mxu0 0.0
    %428 = vmatpush1.msra.mxu0 0.0
    %429 = vmatprep.subr.mxu0 0.0
    %430 = vmatpush1.msra.mxu0 0.0
    %431 = vmatprep.subr.mxu0 0.0
    %432 = vmatpush1.msra.mxu0 0.0
    %433 = vmatprep.subr.mxu0 0.0
    %434 = vmatpush1.msra.mxu0 0.0
    %435 = vmatprep.subr.mxu0 0.0
    %436 = vmatpush1.msra.mxu0 0.0
    %437 = vmatprep.subr.mxu0 0.0
    %438 = vmatpush1.msra.mxu0 0.0
    %439 = vmatprep.subr.mxu0 0.0
    %440 = vmatpush1.msra.mxu0 0.0
    %441 = vmatprep.subr.mxu0 0.0
    %442 = vmatpush1.msra.mxu0 0.0
    %443 = vmatprep.subr.mxu0 0.0
    %444 = vmatpush1.msra.mxu0 0.0
    %445 = vmatprep.subr.mxu0 0.0
    %446 = vmatpush1.msra.mxu0 0.0
    %447 = vmatprep.subr.mxu0 0.0
    %448 = vmatpush1.msra.mxu0 0.0
    %449 = vmatprep.subr.mxu0 0.0
    %450 = vmatpush1.msra.mxu0 0.0
    %451 = vmatprep.subr.mxu0 0.0
    %452 = vmatpush1.msra.mxu0 0.0
    %453 = vmatprep.subr.mxu0 0.0
    %454 = vmatpush1.msra.mxu0 0.0
    %455 = vmatprep.subr.mxu0 0.0
    %456 = vmatpush1.msra.mxu0 0.0
    %457 = vmatprep.subr.mxu0 0.0
    %458 = vmatpush1.msra.mxu0 0.0
    %459 = vmatprep.subr.mxu0 0.0
    %460 = vmatpush1.msra.mxu0 0.0
    %461 = vmatprep.subr.mxu0 0.0
    %462 = vmatpush1.msra.mxu0 0.0
    %463 = vmatprep.subr.mxu0 0.0
    %464 = vmatpush1.msra.mxu0 0.0
    %465 = vmatprep.mubr.f32.mxu0 0.0
    %466 = vmatmul.mubr.f32.gmra.mrb[0].mxu0 %v399
    %v467 = vpop.f32.mrb[0].mxu0
    %v468 = vadd.f32 %v396, %v467
    %v469 = vpop.f32.mrb[0].mxu0
    %470 = vdwg.mxu0
    %v471 = vmax.f32 %v468, 0.0
    %v472 = vlaneseq
    %v473 = vshrl.u32 %v472, 7
    %v474 = vsub.s32 0, %v473
    %v475 = vrot.slane %v392, %v474
    %476 = vmatprep.subr.mxu0 0.0
    %477 = vmatpush1.msra.mxu0 %v376
    %478 = vmatprep.subr.mxu0 0.0
    %479 = vmatpush1.msra.mxu0 %v377
    %480 = vmatprep.subr.mxu0 0.0
    %481 = vmatpush1.msra.mxu0 %v378
    %482 = vmatprep.subr.mxu0 0.0
    %483 = vmatpush1.msra.mxu0 %v379
    %484 = vmatprep.subr.mxu0 0.0
    %485 = vmatpush1.msra.mxu0 %v380
    %486 = vmatprep.subr.mxu0 0.0
    %487 = vmatpush1.msra.mxu0 %v381
    %488 = vmatprep.subr.mxu0 0.0
    %489 = vmatpush1.msra.mxu0 %v382
    %490 = vmatprep.subr.mxu0 0.0
    %491 = vmatpush1.msra.mxu0 %v383
    %492 = vmatprep.subr.mxu0 0.0
    %493 = vmatpush1.msra.mxu0 %v384
    %494 = vmatprep.subr.mxu0 0.0
    %495 = vmatpush1.msra.mxu0 %v385
    %496 = vmatprep.subr.mxu0 0.0
    %497 = vmatpush1.msra.mxu0 %v386
    %498 = vmatprep.subr.mxu0 0.0
    %499 = vmatpush1.msra.mxu0 %v387
    %500 = vmatprep.subr.mxu0 0.0
    %501 = vmatpush1.msra.mxu0 %v388
    %502 = vmatprep.subr.mxu0 0.0
    %503 = vmatpush1.msra.mxu0 %v389
    %504 = vmatprep.subr.mxu0 0.0
    %505 = vmatpush1.msra.mxu0 %v390
    %506 = vmatprep.subr.mxu0 0.0
    %507 = vmatpush1.msra.mxu0 %v391
    %508 = vmatprep.subr.mxu0 0.0
    %509 = vmatpush1.msra.mxu0 0.0
    %510 = vmatprep.subr.mxu0 0.0
    %511 = vmatpush1.msra.mxu0 0.0
    %512 = vmatprep.subr.mxu0 0.0
    %513 = vmatpush1.msra.mxu0 0.0
    %514 = vmatprep.subr.mxu0 0.0
    %515 = vmatpush1.msra.mxu0 0.0
    %516 = vmatprep.subr.mxu0 0.0
    %517 = vmatpush1.msra.mxu0 0.0
    %518 = vmatprep.subr.mxu0 0.0
    %519 = vmatpush1.msra.mxu0 0.0
    %520 = vmatprep.subr.mxu0 0.0
    %521 = vmatpush1.msra.mxu0 0.0
    %522 = vmatprep.subr.mxu0 0.0
    %523 = vmatpush1.msra.mxu0 0.0
    %524 = vmatprep.subr.mxu0 0.0
    %525 = vmatpush1.msra.mxu0 0.0
    %526 = vmatprep.subr.mxu0 0.0
    %527 = vmatpush1.msra.mxu0 0.0
    %528 = vmatprep.subr.mxu0 0.0
    %529 = vmatpush1.msra.mxu0 0.0
    %530 = vmatprep.subr.mxu0 0.0
    %531 = vmatpush1.msra.mxu0 0.0
    %532 = vmatprep.subr.mxu0 0.0
    %533 = vmatpush1.msra.mxu0 0.0
    %534 = vmatprep.subr.mxu0 0.0
    %535 = vmatpush1.msra.mxu0 0.0
    %536 = vmatprep.subr.mxu0 0.0
    %537 = vmatpush1.msra.mxu0 0.0
    %538 = vmatprep.subr.mxu0 0.0
    %539 = vmatpush1.msra.mxu0 0.0
    %540 = vmatprep.mubr.f32.mxu0 0.0
    %541 = vmatmul.mubr.f32.gmra.mrb[0].mxu0 %v471
    %v542 = vpop.f32.mrb[0].mxu0
    %v543 = vadd.f32 %v475, %v542
    %v544 = vpop.f32.mrb[0].mxu0
    %545 = vdwg.mxu0
    %vm546 = vcmask 1024
    %547 = vst.msk [vmem:[%s3] sm:$0x3] %vm546, %v543
    // Predicated region
    $region18: #{tpu_custom_call.1} parent=1 // pred_check
      _
    $region19: #{tpu_custom_call.1} parent=1 // pred_check_branch
      %549 = sbr.rel (0) target = $region21
    $region20: #{tpu_custom_call.1} parent=1 // pred_region
      _
    $region21: #{tpu_custom_call.1} parent=1 // pred_fallthru
      _
    // Predicated region
    $region22: #{tpu_custom_call.1} parent=1 // pred_check
      _
    $region23: #{tpu_custom_call.1} parent=1 // pred_check_branch
      %551 = sbr.rel (0) target = $region25
    $region24: #{tpu_custom_call.1} parent=1 // pred_region
      _
    $region25: #{tpu_custom_call.1} parent=1 // pred_fallthru
      _
    %552 = vsyncpa [#allocation3], 1

</llo_original>
